<compile_context>
chip_gen: v6e
topology: v6e:2x2x1
jax: 0.10.0
libtpu: 0.0.40
codegen_flags: <defaults>
</compile_context>

<pallas_src>
import math
import functools
import numpy as np

import jax
import jax.numpy as jnp
from jax.experimental import pallas as pl
from jax.experimental.pallas import tpu as pltpu


# ---------------------------------------------------------------------------
# Stage 1: fused QKV projection, computed once over all rows.
# Weights are resident (constant index_map); Q is pre-scaled by 1/sqrt(Dh).
# ---------------------------------------------------------------------------
def qkv_proj_kernel(scale, D, x_ref, w_ref, b_ref, q_ref, k_ref, v_ref):
    x = x_ref[0]                                                   # (tr, D) bf16
    qkv = jnp.dot(x, w_ref[...], preferred_element_type=jnp.float32) + b_ref[...]
    q_ref[0] = (qkv[:, :D] * scale).astype(q_ref.dtype)            # scale folded into Q
    k_ref[0] = qkv[:, D:2 * D].astype(k_ref.dtype)
    v_ref[0] = qkv[:, 2 * D:].astype(v_ref.dtype)


# ---------------------------------------------------------------------------
# Stage 2: flash attention (online softmax over KV tiles) fused with the
# output projection.  One grid step = (batch b, query tile sq, head-group g,
# kv tile kv); g and kv are "arbitrary" (accumulate into scratch), b/sq are
# "parallel".
# ---------------------------------------------------------------------------
def mha_attn_kernel(G, Dh, q_ref, k_ref, v_ref, wo_ref, bo_ref, o_ref,
                    acc_ref, ctx_ref, m_ref, l_ref):
    g = pl.program_id(2)
    kv = pl.program_id(3)
    last_g = pl.num_programs(2) - 1
    last_kv = pl.num_programs(3) - 1
    Dg = G * Dh

    @pl.when((g == 0) & (kv == 0))
    def _init_out():
        # start the (tq, D) output accumulator at the output-projection bias
        acc_ref[...] = jnp.broadcast_to(bo_ref[...], acc_ref.shape)

    @pl.when(kv == 0)
    def _init_group():
        m_ref[...] = jnp.full(m_ref.shape, -jnp.inf, dtype=m_ref.dtype)
        l_ref[...] = jnp.zeros(l_ref.shape, dtype=l_ref.dtype)
        ctx_ref[...] = jnp.zeros(ctx_ref.shape, dtype=ctx_ref.dtype)

    q = q_ref[0]    # (tq, Dg) bf16, already scaled by 1/sqrt(Dh)
    k = k_ref[0]    # (tk, Dg) bf16
    v = v_ref[0]    # (tk, Dg) bf16

    # Static unroll over the G real heads in this lane-group (no zero padding).
    for h in range(G):
        lo, hi = h * Dh, (h + 1) * Dh
        # q_h @ k_h^T without an explicit transpose (contract dim 1 of both).
        s = jax.lax.dot_general(
            q[:, lo:hi], k[:, lo:hi],
            dimension_numbers=(((1,), (1,)), ((), ())),
            preferred_element_type=jnp.float32)                     # (tq, tk) f32

        m_prev = m_ref[h]                                           # (tq, 1)
        m_new = jnp.maximum(m_prev, jnp.max(s, axis=-1, keepdims=True))
        alpha = jnp.exp(m_prev - m_new)
        p = jnp.exp(s - m_new)                                      # (tq, tk) f32
        l_ref[h] = alpha * l_ref[h] + jnp.sum(p, axis=-1, keepdims=True)
        pv = jnp.dot(p.astype(jnp.bfloat16), v[:, lo:hi],
                     preferred_element_type=jnp.float32)            # (tq, Dh)
        ctx_ref[:, lo:hi] = alpha * ctx_ref[:, lo:hi] + pv
        m_ref[h] = m_new

    @pl.when(kv == last_kv)
    def _finish_group():
        # Fold the softmax normalisation into the (tq, Dh) context (not the
        # (tq, tk) probabilities); EUP reciprocal.
        for h in range(G):
            lo, hi = h * Dh, (h + 1) * Dh
            ctx_ref[:, lo:hi] = ctx_ref[:, lo:hi] * pl.reciprocal(
                l_ref[h], approx=True)
        # Output projection for this head group: contract over the real Dg rows
        # of the resident Wo (sliced in-kernel; Wo is fetched from HBM once).
        row0 = pl.multiple_of(g * Dg, Dg)
        wo_g = wo_ref[pl.ds(row0, Dg), :]                           # (Dg, D) bf16
        acc_ref[...] += jnp.dot(ctx_ref[...].astype(jnp.bfloat16), wo_g,
                                preferred_element_type=jnp.float32)

    @pl.when((g == last_g) & (kv == last_kv))
    def _store():
        o_ref[0] = acc_ref[...].astype(o_ref.dtype)                 # single lane-dense store


# ---------------------------------------------------------------------------
# Wrapper: bf16 inputs/weights, head grouping, two pallas_calls.
# ---------------------------------------------------------------------------
def multi_head_attention(x, params, n_heads, *, tq=None, tk=None, tr=None):
    B, S, D = x.shape
    Dh = D // n_heads
    assert Dh * n_heads == D
    scale = 1.0 / math.sqrt(Dh)              # PyTorch scales by sqrt(q.shape[-1]) = sqrt(Dh)

    # Head grouping: smallest G (dividing n_heads) with G*Dh a multiple of 128;
    # otherwise fall back to the full head dimension (block == full array dim).
    if Dh % 128 == 0:
        G = 1
    else:
        G = n_heads
        for cand in range(1, n_heads + 1):
            if n_heads % cand == 0 and (cand * Dh) % 128 == 0:
                G = cand
                break
    Dg = G * Dh
    Hg = n_heads // G

    # Tile defaults (v6e/v7x like 256; drop tq to 128 on v5e if desired).
    if tr is None:
        tr = min(S, 256)
    if tq is None:
        tq = min(S, 256)
    if tk is None:
        tk = min(S, 256)
    assert S % tr == 0 and S % tq == 0 and S % tk == 0
    nq, nk = S // tq, S // tk

    # bf16 once, in the wrapper (weights stay resident in VMEM inside kernels).
    x_bf = x.astype(jnp.bfloat16)
    w_qkv = params["w_qkv"].astype(jnp.bfloat16)    # (D, 3D)
    b_qkv = params["b_qkv"].astype(jnp.float32)     # (1, 3D)
    wo = params["wo"].astype(jnp.bfloat16)          # (D, D)
    bo = params["bo"].astype(jnp.float32)           # (1, D)

    vmem_limit = 64 * 1024 * 1024

    # -------- stage 1: QKV projection (once; Q pre-scaled) -----------------
    qkv_fn = pl.pallas_call(
        functools.partial(qkv_proj_kernel, scale, D),
        out_shape=(jax.ShapeDtypeStruct((B, S, D), jnp.bfloat16),) * 3,
        grid=(B, S // tr),
        in_specs=[
            pl.BlockSpec((1, tr, D), lambda b, r: (b, r, 0)),        # x row tile
            pl.BlockSpec((D, 3 * D), lambda b, r: (0, 0)),           # Wqkv resident
            pl.BlockSpec((1, 3 * D), lambda b, r: (0, 0)),           # bqkv resident
        ],
        out_specs=[pl.BlockSpec((1, tr, D), lambda b, r: (b, r, 0))] * 3,
        compiler_params=pltpu.CompilerParams(
            dimension_semantics=("parallel", "parallel"),
            vmem_limit_bytes=vmem_limit),
    )
    q, k, v = qkv_fn(x_bf, w_qkv, b_qkv)

    # -------- stage 2: flash attention + fused output projection ------------
    attn_fn = pl.pallas_call(
        functools.partial(mha_attn_kernel, G, Dh),
        out_shape=jax.ShapeDtypeStruct((B, S, D), x.dtype),
        grid=(B, nq, Hg, nk),
        in_specs=[
            pl.BlockSpec((1, tq, Dg), lambda b, sq, g, kv: (b, sq, g)),  # Q tile (group g lanes)
            pl.BlockSpec((1, tk, Dg), lambda b, sq, g, kv: (b, kv, g)),  # K tile
            pl.BlockSpec((1, tk, Dg), lambda b, sq, g, kv: (b, kv, g)),  # V tile
            pl.BlockSpec((D, D), lambda b, sq, g, kv: (0, 0)),           # Wo resident
            pl.BlockSpec((1, D), lambda b, sq, g, kv: (0, 0)),           # bo resident
        ],
        out_specs=pl.BlockSpec((1, tq, D), lambda b, sq, g, kv: (b, sq, 0)),
        scratch_shapes=[
            pltpu.VMEM((tq, D), jnp.float32),     # acc: projected output across groups
            pltpu.VMEM((tq, Dg), jnp.float32),    # ctx: un-normalised group context
            pltpu.VMEM((G, tq, 1), jnp.float32),  # per-head running max
            pltpu.VMEM((G, tq, 1), jnp.float32),  # per-head running sum
        ],
        compiler_params=pltpu.CompilerParams(
            dimension_semantics=("parallel", "parallel", "arbitrary", "arbitrary"),
            vmem_limit_bytes=vmem_limit),
    )
    return attn_fn(q, k, v, wo, bo)


# ---------------------------------------------------------------------------
# Pure-JAX reference mirroring the PyTorch forward (mask=None, eval dropout).
# ---------------------------------------------------------------------------
def reference_mha(x, params, n_heads):
    B, S, D = x.shape
    Dh = D // n_heads
    qkv = x @ params["w_qkv"] + params["b_qkv"]
    q, k, v = qkv[..., :D], qkv[..., D:2 * D], qkv[..., 2 * D:]

    def split(t):
        return t.reshape(B, S, n_heads, Dh).transpose(0, 2, 1, 3)

    q, k, v = split(q), split(k), split(v)
    scores = jnp.einsum("bhqd,bhkd->bhqk", q, k) / math.sqrt(Dh)
    p = jax.nn.softmax(scores, axis=-1)
    ctx = jnp.einsum("bhqk,bhkd->bhqd", p, v)
    ctx = ctx.transpose(0, 2, 1, 3).reshape(B, S, D)
    return ctx @ params["wo"] + params["bo"]


def init_params(key, D):
    # nn.Linear(D, 3D) and nn.Linear(D, D), stored as (in, out) so every matmul
    # is y = x @ W + b.
    ks = jax.random.split(key, 4)
    s = 1.0 / math.sqrt(D)
    return {
        "w_qkv": (s * jax.random.normal(ks[0], (D, 3 * D))).astype(jnp.float32),
        "b_qkv": (s * jax.random.normal(ks[1], (1, 3 * D))).astype(jnp.float32),
        "wo":    (s * jax.random.normal(ks[2], (D, D))).astype(jnp.float32),
        "bo":    (s * jax.random.normal(ks[3], (1, D))).astype(jnp.float32),
    }


if __name__ == "__main__":
    # Small MultiHeadAttention config: batch=2, seq=16, out_dim=128, n_heads=4.
    B, S, D, H = 2, 16, 128, 4

    key = jax.random.PRNGKey(0)
    kx, kp = jax.random.split(key)
    x = jax.random.normal(kx, (B, S, D), dtype=jnp.float32)
    params = init_params(kp, D)

    out = multi_head_attention(x, params, H)
    out = jax.block_until_ready(out)
    assert out.shape == (B, S, D), out.shape

    ref = reference_mha(x, params, H)
    # bf16 matmul operands + approx reciprocal perturb results at ~1e-3 level.
    np.testing.assert_allclose(np.asarray(out), np.asarray(ref), rtol=2e-2, atol=2e-2)

    print("KERNEL_OK")
</pallas_src>

<mosaic_0001>
module attributes {stable_mosaic.version = 11 : i64} {
  func.func @qkv_proj_kernel(%arg0: i32, %arg1: i32, %arg2: memref<1x16x128xbf16, #tpu.memory_space<vmem>>, %arg3: memref<128x384xbf16, #tpu.memory_space<vmem>>, %arg4: memref<1x384xf32, #tpu.memory_space<vmem>>, %arg5: memref<1x16x128xbf16, #tpu.memory_space<vmem>>, %arg6: memref<1x16x128xbf16, #tpu.memory_space<vmem>>, %arg7: memref<1x16x128xbf16, #tpu.memory_space<vmem>>) attributes {dimension_semantics = [#tpu.dimension_semantics<parallel>, #tpu.dimension_semantics<parallel>], iteration_bounds = array<i64: 2, 1>, scalar_prefetch = 0 : i64, scratch_operands = 0 : i64, tpu.core_type = #tpu.core_type<tc>, window_params = [{transform_indices = @transform_0, window_bounds = array<i64: 1, 16, 128>}, {pipeline_mode = #tpu.pipeline_mode<synchronous>, transform_indices = @transform_1, window_bounds = array<i64: 128, 384>}, {pipeline_mode = #tpu.pipeline_mode<synchronous>, transform_indices = @transform_2, window_bounds = array<i64: 1, 384>}, {transform_indices = @transform_3, window_bounds = array<i64: 1, 16, 128>}, {transform_indices = @transform_4, window_bounds = array<i64: 1, 16, 128>}, {transform_indices = @transform_5, window_bounds = array<i64: 1, 16, 128>}]} {
    %c0 = arith.constant 0 : index
    %c0_0 = arith.constant 0 : index
    %c0_1 = arith.constant 0 : index
    %0 = vector.load %arg2[%c0, %c0_0, %c0_1] : memref<1x16x128xbf16, #tpu.memory_space<vmem>>, vector<1x16x128xbf16>
    %1 = vector.shape_cast %0 : vector<1x16x128xbf16> to vector<16x128xbf16>
    %c0_2 = arith.constant 0 : index
    %c0_3 = arith.constant 0 : index
    %2 = vector.load %arg3[%c0_2, %c0_3] : memref<128x384xbf16, #tpu.memory_space<vmem>>, vector<128x384xbf16>
    %cst = arith.constant dense<0.000000e+00> : vector<16x384xf32>
    %3 = tpu.matmul %1, %2, %cst {dimension_numbers = #tpu.dot_dimension_numbers<[1], [0], [0], [1], [0, 0, 1, 1], [], []>} : vector<16x128xbf16>, vector<128x384xbf16>, vector<16x384xf32> -> vector<16x384xf32>
    %c0_4 = arith.constant 0 : index
    %c0_5 = arith.constant 0 : index
    %4 = vector.load %arg4[%c0_4, %c0_5] : memref<1x384xf32, #tpu.memory_space<vmem>>, vector<1x384xf32>
    %5 = vector.broadcast %4 : vector<1x384xf32> to vector<16x384xf32>
    %6 = arith.addf %3, %5 : vector<16x384xf32>
    %7 = vector.extract_strided_slice %6 {offsets = [0, 0], sizes = [16, 128], strides = [1, 1]} : vector<16x384xf32> to vector<16x128xf32>
    %cst_6 = arith.constant 0.176776692 : f32
    %8 = vector.broadcast %cst_6 : f32 to vector<16x128xf32>
    %9 = arith.mulf %7, %8 : vector<16x128xf32>
    %10 = arith.truncf %9 : vector<16x128xf32> to vector<16x128xbf16>
    %c0_7 = arith.constant 0 : index
    %c0_8 = arith.constant 0 : index
    %c0_9 = arith.constant 0 : index
    %11 = vector.load %arg5[%c0_7, %c0_8, %c0_9] : memref<1x16x128xbf16, #tpu.memory_space<vmem>>, vector<1x16x128xbf16>
    %12 = vector.shape_cast %11 : vector<1x16x128xbf16> to vector<16x128xbf16>
    %13 = vector.shape_cast %10 : vector<16x128xbf16> to vector<1x16x128xbf16>
    tpu.vector_store %arg5[%c0_7, %c0_8, %c0_9], %13 {strides = array<i32>} : memref<1x16x128xbf16, #tpu.memory_space<vmem>>, vector<1x16x128xbf16>,
    %14 = vector.extract_strided_slice %6 {offsets = [0, 128], sizes = [16, 128], strides = [1, 1]} : vector<16x384xf32> to vector<16x128xf32>
    %15 = arith.truncf %14 : vector<16x128xf32> to vector<16x128xbf16>
    %c0_10 = arith.constant 0 : index
    %c0_11 = arith.constant 0 : index
    %c0_12 = arith.constant 0 : index
    %16 = vector.load %arg6[%c0_10, %c0_11, %c0_12] : memref<1x16x128xbf16, #tpu.memory_space<vmem>>, vector<1x16x128xbf16>
    %17 = vector.shape_cast %16 : vector<1x16x128xbf16> to vector<16x128xbf16>
    %18 = vector.shape_cast %15 : vector<16x128xbf16> to vector<1x16x128xbf16>
    tpu.vector_store %arg6[%c0_10, %c0_11, %c0_12], %18 {strides = array<i32>} : memref<1x16x128xbf16, #tpu.memory_space<vmem>>, vector<1x16x128xbf16>,
    %19 = vector.extract_strided_slice %6 {offsets = [0, 256], sizes = [16, 128], strides = [1, 1]} : vector<16x384xf32> to vector<16x128xf32>
    %20 = arith.truncf %19 : vector<16x128xf32> to vector<16x128xbf16>
    %c0_13 = arith.constant 0 : index
    %c0_14 = arith.constant 0 : index
    %c0_15 = arith.constant 0 : index
    %21 = vector.load %arg7[%c0_13, %c0_14, %c0_15] : memref<1x16x128xbf16, #tpu.memory_space<vmem>>, vector<1x16x128xbf16>
    %22 = vector.shape_cast %21 : vector<1x16x128xbf16> to vector<16x128xbf16>
    %23 = vector.shape_cast %20 : vector<16x128xbf16> to vector<1x16x128xbf16>
    tpu.vector_store %arg7[%c0_13, %c0_14, %c0_15], %23 {strides = array<i32>} : memref<1x16x128xbf16, #tpu.memory_space<vmem>>, vector<1x16x128xbf16>,
    return
  }
  func.func @transform_0(%arg0: i32, %arg1: i32) -> (i32, i32, i32) {
    %c0_i32 = arith.constant 0 : i32
    %c0_i32_0 = arith.constant 0 : i32
    return %arg0, %arg1, %c0_i32 : i32, i32, i32
  }
  func.func @transform_1(%arg0: i32, %arg1: i32) -> (i32, i32) {
    %c0_i32 = arith.constant 0 : i32
    %c0_i32_0 = arith.constant 0 : i32
    %c0_i32_1 = arith.constant 0 : i32
    return %c0_i32, %c0_i32_0 : i32, i32
  }
  func.func @transform_2(%arg0: i32, %arg1: i32) -> (i32, i32) {
    %c0_i32 = arith.constant 0 : i32
    %c0_i32_0 = arith.constant 0 : i32
    %c0_i32_1 = arith.constant 0 : i32
    return %c0_i32, %c0_i32_0 : i32, i32
  }
  func.func @transform_3(%arg0: i32, %arg1: i32) -> (i32, i32, i32) {
    %c0_i32 = arith.constant 0 : i32
    %c0_i32_0 = arith.constant 0 : i32
    return %arg0, %arg1, %c0_i32 : i32, i32, i32
  }
  func.func @transform_4(%arg0: i32, %arg1: i32) -> (i32, i32, i32) {
    %c0_i32 = arith.constant 0 : i32
    %c0_i32_0 = arith.constant 0 : i32
    return %arg0, %arg1, %c0_i32 : i32, i32, i32
  }
  func.func @transform_5(%arg0: i32, %arg1: i32) -> (i32, i32, i32) {
    %c0_i32 = arith.constant 0 : i32
    %c0_i32_0 = arith.constant 0 : i32
    return %arg0, %arg1, %c0_i32 : i32, i32, i32
  }
}

</mosaic_0001>

<llo_original>
// kernel: tpu_custom_call.1
$region0: #{tpu_custom_call.1}
  #allocation0 [shape = 'u32[]', space=smem, size = 0x4, offset = 0x4, fixed_abs, tag = 'smem constant byte address 0x4 - core index']
  #allocation1 [shape = 'u32[144,128]{1,0:T(1,128)}', space=vmem, size = 0x12000, scoped, tag = 'internal scratch']
  %s0 = inlined_call_operand.hbm [shape: bf16[2,16,128], index: 0, kind: input, shape index: {}]
  %s1 = inlined_call_operand.hbm [shape: bf16[128,384], index: 1, kind: input, shape index: {}]
  %s2 = inlined_call_operand.vmem [shape: f32[1,384], index: 2, kind: input, shape index: {}]
  %s3 = inlined_call_operand.hbm [shape: bf16[2,16,128], index: 3, kind: output, shape index: {0}]
  %s4 = inlined_call_operand.hbm [shape: bf16[2,16,128], index: 4, kind: output, shape index: {1}]
  %s5 = inlined_call_operand.hbm [shape: bf16[2,16,128], index: 5, kind: output, shape index: {2}]
  %6 = xla_tuple %s3, %s4, %s5
  %s7 = sld [smem:[#allocation0]]
  $region69: #{tpu_custom_call.1} parent=0
    _
  %s9 = ssub.s32 1, %s7
  %s10 = scalar_select 0, %s9, %s7
  $region1: #{tpu_custom_call.1} parent=0
    #allocation2 [shape = 'u8[8192]{0}', space=vmem, size = 0x2000, scoped, tag = 'input window, operand 0']
    #allocation3 [shape = 's32[2]{0}', space=sflag, size = 0x8, scoped, tag = 'scoped memory for tpu_custom_call.1']
    #allocation4 [shape = 's32[2]{0}', space=sflag, size = 0x8, scoped, tag = 'scoped memory for tpu_custom_call.1']
    #allocation5 [shape = 'u8[98304]{0}', space=vmem, size = 0x18000, scoped, tag = 'input window, operand 1, single buffered']
    #allocation6 [shape = 's32[1]{0}', space=sflag, size = 0x4, scoped, tag = 'scoped memory for tpu_custom_call.1']
    #allocation7 [shape = 'u8[8192]{0}', space=vmem, size = 0x2000, scoped, tag = 'output window, operand 0']
    #allocation8 [shape = 'u8[8192]{0}', space=vmem, size = 0x2000, scoped, tag = 'output window, operand 1']
    #allocation9 [shape = 's32[2]{0}', space=sflag, size = 0x8, scoped, tag = 'scoped memory for tpu_custom_call.1']
    #allocation10 [shape = 'u8[8192]{0}', space=vmem, size = 0x2000, scoped, tag = 'output window, operand 2']
    %11 = vsyncpa [#allocation3], 0
    %s12 = scalar_lea.sflag [#allocation3], 1
    %13 = vsyncpa %s12, 0
    %14 = vsyncpa [#allocation6], 0
    %15 = vsyncpa [#allocation4], 0
    %s16 = scalar_lea.sflag [#allocation4], 1
    %17 = vsyncpa %s16, 0
    %18 = vsyncpa [#allocation9], 0
    %s19 = scalar_lea.sflag [#allocation9], 1
    %20 = vsyncpa %s19, 0
    loop: start=0, step=1, limit=4
    $region2: #{tpu_custom_call.1} parent=1 // loop_pre_header
      _
    $region3: #{tpu_custom_call.1} parent=1 // loop_header
      %s22 = sphi 0, %s26
      %p23 = scmp.ge.s32.totalorder %s22, 4
      %s29 = sphi 0, %s41
      %s30 = sphi 0, %s37
      %s31 = sphi 0, %s29
      %s32 = sphi 0, %s30
      %s33 = sphi 0, %s31
      %s34 = sphi 0, %s32
      %s46 = sphi 0, %s48
      %s49 = sphi 0, %s46
      %s50 = sphi 0, %s49
      %s66 = sphi 0, %s50
      %s70 = sphi 0, %s70
      %s72 = sphi 0, %s70
      %s73 = sphi 0, %s72
      %s87 = sphi 0, %s73
      %s91 = sphi 0, %s91
      %s93 = sphi 0, %s91
      %s94 = sphi 0, %s93
      %s108 = sphi 0, %s94
      %s116 = sphi 0, %s118
      %s119 = sphi 0, %s116
      %s120 = sphi 0, %s119
      %s136 = sphi 0, %s120
      %s144 = sphi 0, %s146
      %s147 = sphi 0, %s144
      %s148 = sphi 0, %s147
      %s164 = sphi 0, %s148
      %s172 = sphi 0, %s174
      %s175 = sphi 0, %s172
      %s176 = sphi 0, %s175
      %s192 = sphi 0, %s176
    $region4: #{tpu_custom_call.1} parent=1 // loop_header_branch
      %25 = sbr.rel (%p23) target = $region8
    $region5: #{tpu_custom_call.1} parent=1 // loop_body
      %s27 = ssub.s32 %s22, 1
      %s28 = ssub.s32 %s22, 2
      %s35 = sadd.s32 1, %s30
      %p36 = scmp.ge.s32.totalorder %s35, 1
      %s37 = scalar_select %p36, 0, %s35
      %s38 = sadd.s32 1, %s29
      %s39 = scalar_select %p36, %s38, %s29
      %p40 = scmp.ge.s32.totalorder %s39, 2
      %s41 = scalar_select %p40, 0, %s39
      %s42 = ssub.s32 %s29, %s41
      %s43 = ssub.s32 %s30, %s37
      %s44 = sor.u32 %s42, %s43
      %p45 = scmp.eq.s32.totalorder %s44, 0
      %s47 = sadd.s32 %s46, 1
      %s48 = scalar_select %p45, %s46, %s47
      %p51 = pneg %p45
      %p52 = scmp.eq.s32.totalorder %s22, 1
      %p53 = por %p51, %p52
      %p54 = scmp.ne.s32.totalorder %s46, %s49
      %p55 = scmp.eq.s32.totalorder %s22, 0
      %p56 = por %p54, %p55
      %p57 = scmp.ne.s32.totalorder %s46, %s49
      %p58 = scmp.eq.s32.totalorder %s27, 1
      %p59 = por %p57, %p58
      %p60 = scmp.ne.s32.totalorder %s49, %s50
      %p61 = scmp.eq.s32.totalorder %s27, 0
      %p62 = por %p60, %p61
      %p63 = scmp.ne.s32.totalorder %s49, %s50
      %p64 = scmp.eq.s32.totalorder %s28, 1
      %p65 = por %p63, %p64
      %p67 = scmp.ne.s32.totalorder %s50, %s66
      %p68 = scmp.eq.s32.totalorder %s28, 0
      %p69 = por %p67, %p68
      %s71 = sadd.s32 %s70, 1
      %p74 = scmp.eq.s32.totalorder %s22, 1
      %p75 = scmp.ne.s32.totalorder %s70, %s72
      %p76 = scmp.eq.s32.totalorder %s22, 0
      %p77 = por %p75, %p76
      %p78 = scmp.ne.s32.totalorder %s70, %s72
      %p79 = scmp.eq.s32.totalorder %s27, 1
      %p80 = por %p78, %p79
      %p81 = scmp.ne.s32.totalorder %s72, %s73
      %p82 = scmp.eq.s32.totalorder %s27, 0
      %p83 = por %p81, %p82
      %p84 = scmp.ne.s32.totalorder %s72, %s73
      %p85 = scmp.eq.s32.totalorder %s28, 1
      %p86 = por %p84, %p85
      %p88 = scmp.ne.s32.totalorder %s73, %s87
      %p89 = scmp.eq.s32.totalorder %s28, 0
      %p90 = por %p88, %p89
      %s92 = sadd.s32 %s91, 1
      %p95 = scmp.eq.s32.totalorder %s22, 1
      %p96 = scmp.ne.s32.totalorder %s91, %s93
      %p97 = scmp.eq.s32.totalorder %s22, 0
      %p98 = por %p96, %p97
      %p99 = scmp.ne.s32.totalorder %s91, %s93
      %p100 = scmp.eq.s32.totalorder %s27, 1
      %p101 = por %p99, %p100
      %p102 = scmp.ne.s32.totalorder %s93, %s94
      %p103 = scmp.eq.s32.totalorder %s27, 0
      %p104 = por %p102, %p103
      %p105 = scmp.ne.s32.totalorder %s93, %s94
      %p106 = scmp.eq.s32.totalorder %s28, 1
      %p107 = por %p105, %p106
      %p109 = scmp.ne.s32.totalorder %s94, %s108
      %p110 = scmp.eq.s32.totalorder %s28, 0
      %p111 = por %p109, %p110
      %s112 = ssub.s32 %s29, %s41
      %s113 = ssub.s32 %s30, %s37
      %s114 = sor.u32 %s112, %s113
      %p115 = scmp.eq.s32.totalorder %s114, 0
      %s117 = sadd.s32 %s116, 1
      %s118 = scalar_select %p115, %s116, %s117
      %p121 = pneg %p115
      %p122 = scmp.eq.s32.totalorder %s22, 1
      %p123 = por %p121, %p122
      %p124 = scmp.ne.s32.totalorder %s116, %s119
      %p125 = scmp.eq.s32.totalorder %s22, 0
      %p126 = por %p124, %p125
      %p127 = scmp.ne.s32.totalorder %s116, %s119
      %p128 = scmp.eq.s32.totalorder %s27, 1
      %p129 = por %p127, %p128
      %p130 = scmp.ne.s32.totalorder %s119, %s120
      %p131 = scmp.eq.s32.totalorder %s27, 0
      %p132 = por %p130, %p131
      %p133 = scmp.ne.s32.totalorder %s119, %s120
      %p134 = scmp.eq.s32.totalorder %s28, 1
      %p135 = por %p133, %p134
      %p137 = scmp.ne.s32.totalorder %s120, %s136
      %p138 = scmp.eq.s32.totalorder %s28, 0
      %p139 = por %p137, %p138
      %s140 = ssub.s32 %s29, %s41
      %s141 = ssub.s32 %s30, %s37
      %s142 = sor.u32 %s140, %s141
      %p143 = scmp.eq.s32.totalorder %s142, 0
      %s145 = sadd.s32 %s144, 1
      %s146 = scalar_select %p143, %s144, %s145
      %p149 = pneg %p143
      %p150 = scmp.eq.s32.totalorder %s22, 1
      %p151 = por %p149, %p150
      %p152 = scmp.ne.s32.totalorder %s144, %s147
      %p153 = scmp.eq.s32.totalorder %s22, 0
      %p154 = por %p152, %p153
      %p155 = scmp.ne.s32.totalorder %s144, %s147
      %p156 = scmp.eq.s32.totalorder %s27, 1
      %p157 = por %p155, %p156
      %p158 = scmp.ne.s32.totalorder %s147, %s148
      %p159 = scmp.eq.s32.totalorder %s27, 0
      %p160 = por %p158, %p159
      %p161 = scmp.ne.s32.totalorder %s147, %s148
      %p162 = scmp.eq.s32.totalorder %s28, 1
      %p163 = por %p161, %p162
      %p165 = scmp.ne.s32.totalorder %s148, %s164
      %p166 = scmp.eq.s32.totalorder %s28, 0
      %p167 = por %p165, %p166
      %s168 = ssub.s32 %s29, %s41
      %s169 = ssub.s32 %s30, %s37
      %s170 = sor.u32 %s168, %s169
      %p171 = scmp.eq.s32.totalorder %s170, 0
      %s173 = sadd.s32 %s172, 1
      %s174 = scalar_select %p171, %s172, %s173
      %p177 = pneg %p171
      %p178 = scmp.eq.s32.totalorder %s22, 1
      %p179 = por %p177, %p178
      %p180 = scmp.ne.s32.totalorder %s172, %s175
      %p181 = scmp.eq.s32.totalorder %s22, 0
      %p182 = por %p180, %p181
      %p183 = scmp.ne.s32.totalorder %s172, %s175
      %p184 = scmp.eq.s32.totalorder %s27, 1
      %p185 = por %p183, %p184
      %p186 = scmp.ne.s32.totalorder %s175, %s176
      %p187 = scmp.eq.s32.totalorder %s27, 0
      %p188 = por %p186, %p187
      %p189 = scmp.ne.s32.totalorder %s175, %s176
      %p190 = scmp.eq.s32.totalorder %s28, 1
      %p191 = por %p189, %p190
      %p193 = scmp.ne.s32.totalorder %s176, %s192
      %p194 = scmp.eq.s32.totalorder %s28, 0
      %p195 = por %p193, %p194
      %p196 = scmp.le.s32.totalorder 1, %s22
      %p197 = scmp.lt.s32.totalorder %s22, 3
      %p198 = pnand %p196, %p197
      %p199 = pneg %p198
      // Predicated region
      $region9: #{tpu_custom_call.1} parent=5 // pred_check
        _
      $region10: #{tpu_custom_call.1} parent=5 // pred_check_branch
        %201 = sbr.rel (%p198) target = $region12
      $region11: #{tpu_custom_call.1} parent=5 // pred_region
        %s202 = ssub.s32 %s22, 1
        // Predicated region
        $region13: #{tpu_custom_call.1} parent=11 // pred_check
          %p203 = pneg %p83
        $region14: #{tpu_custom_call.1} parent=11 // pred_check_branch
          %205 = sbr.rel (%p203) target = $region16
        $region15: #{tpu_custom_call.1} parent=11 // pred_region
          %s207 = ssub.s32 3072, 3072
          %208 = vsyncadd [#allocation6], %s207
          %s209 = sshll.u32 [#allocation5], 4
          %s210 = int_to_ptr.vmem [resolvable:$true] %s209
          %215 = dma.hbm_to_vmem [thread:$0]  %s1, 3072, %s210, [#allocation6], 192, 192, 12
        $region16: #{tpu_custom_call.1} parent=11 // pred_fallthru
          _
        // Predicated region
        $region17: #{tpu_custom_call.1} parent=11 // pred_check
          %p216 = pneg %p104
        $region18: #{tpu_custom_call.1} parent=11 // pred_check_branch
          %218 = sbr.rel (%p216) target = $region20
        $region19: #{tpu_custom_call.1} parent=11 // pred_region
          _
        $region20: #{tpu_custom_call.1} parent=11 // pred_fallthru
          _
      $region12: #{tpu_custom_call.1} parent=5 // pred_fallthru
        _
      %p219 = scmp.lt.s32.totalorder %s22, 2
      // Predicated region
      $region21: #{tpu_custom_call.1} parent=5 // pred_check
        %p220 = pneg %p219
      $region22: #{tpu_custom_call.1} parent=5 // pred_check_branch
        %222 = sbr.rel (%p220) target = $region24
      $region23: #{tpu_custom_call.1} parent=5 // pred_region
        // Predicated region
        $region25: #{tpu_custom_call.1} parent=23 // pred_check
          %p223 = pneg %p56
        $region26: #{tpu_custom_call.1} parent=23 // pred_check_branch
          %225 = sbr.rel (%p223) target = $region28
        $region27: #{tpu_custom_call.1} parent=23 // pred_region
          %s226 = sand.u32 %s46, 1
          %s227 = scalar_lea.sflag [#allocation3], %s226
          %s228 = sand.u32 %s46, 1
          %s229 = smul.addr %s228, 8
          %s230 = scalar_lea.vmem [#allocation2], %s229
          %s231 = smul.u32 2, %s30
          %s233 = ssub.s32 128, 128
          %234 = vsyncadd %s227, %s233
          %s235 = smul.addr %s29, 2
          %s236 = sadd.s32 %s231, %s235
          %s237 = smul.addr %s236, 64
          %s238 = scalar_lea.hbm %s0, %s237
          %s239 = sshll.u32 %s230, 4
          %s240 = int_to_ptr.vmem [resolvable:$true] %s239
          %245 = dma.hbm_to_vmem [thread:$0]  %s238, 128, %s240, %s227, 64, 64, 4
        $region28: #{tpu_custom_call.1} parent=23 // pred_fallthru
          _
      $region24: #{tpu_custom_call.1} parent=5 // pred_fallthru
        _
      %p246 = scmp.le.s32.totalorder 1, %s22
      %p247 = scmp.lt.s32.totalorder %s22, 3
      %p248 = pnand %p246, %p247
      %p249 = pneg %p248
      // Predicated region
      $region29: #{tpu_custom_call.1} parent=5 // pred_check
        _
      $region30: #{tpu_custom_call.1} parent=5 // pred_check_branch
        %251 = sbr.rel (%p248) target = $region32
      $region31: #{tpu_custom_call.1} parent=5 // pred_region
        %s252 = ssub.s32 %s22, 1
        %s253 = sand.u32 %s49, 1
        %s254 = scalar_lea.sflag [#allocation3], %s253
        %s255 = sand.u32 %s49, 1
        %s256 = smul.addr %s255, 8
        %s257 = scalar_lea.vmem [#allocation2], %s256
        // Predicated region
        $region33: #{tpu_custom_call.1} parent=31 // pred_check
          %p258 = pneg %p62
        $region34: #{tpu_custom_call.1} parent=31 // pred_check_branch
          %260 = sbr.rel (%p258) target = $region36
        $region35: #{tpu_custom_call.1} parent=31 // pred_region
          %261 = dma.done %s254, 128
        $region36: #{tpu_custom_call.1} parent=31 // pred_fallthru
          _
        // Predicated region
        $region37: #{tpu_custom_call.1} parent=31 // pred_check
          %p262 = pneg %p83
        $region38: #{tpu_custom_call.1} parent=31 // pred_check_branch
          %264 = sbr.rel (%p262) target = $region40
        $region39: #{tpu_custom_call.1} parent=31 // pred_region
          %265 = dma.done [#allocation6], 3072
        $region40: #{tpu_custom_call.1} parent=31 // pred_fallthru
          _
        %s266 = sand.u32 %s49, 1
        %s267 = scalar_lea.sflag [#allocation3], %s266
        %s268 = sand.u32 %s49, 1
        %s269 = smul.addr %s268, 8
        %s270 = scalar_lea.vmem [#allocation2], %s269
        %p271 = pneg %p62
        %p272 = pneg %p59
        %p273 = pneg %p83
        %p274 = pneg %p80
        %p275 = pneg %p104
        %p276 = pneg %p101
        %p277 = pneg %p132
        %p278 = pneg %p129
        %s279 = sand.u32 %s119, 1
        %s280 = scalar_lea.sflag [#allocation4], %s279
        %s281 = sand.u32 %s119, 1
        %s282 = smul.addr %s281, 8
        %s283 = scalar_lea.vmem [#allocation7], %s282
        %p284 = pneg %p160
        %p285 = pneg %p157
        %s286 = sand.u32 %s27, 1
        %s287 = scalar_lea.sflag [#allocation9], %s286
        %s288 = sand.u32 %s147, 1
        %s289 = smul.addr %s288, 8
        %s290 = scalar_lea.vmem [#allocation8], %s289
        %p291 = pneg %p188
        %p292 = pneg %p185
        %s293 = sand.u32 %s27, 1
        %s294 = scalar_lea.sflag [#allocation9], %s293
        %s295 = sand.u32 %s175, 1
        %s296 = smul.addr %s295, 8
        %s297 = scalar_lea.vmem [#allocation10], %s296
        %s298 = smul.u32 2, %s32
        %s299 = smul.u32 2, %s32
        %s300 = smul.u32 2, %s32
        %s301 = smul.u32 2, %s32
        %v303 = vld [vmem:[%s257] sm:$0xf]
        %v304 = vld [vmem:[%s257 + $0x4] sm:$0xf]
        %v305 = vld [vmem:[#allocation5] sm:$0xff]
        %v306 = vld [vmem:[#allocation5 + $0x8] sm:$0xf]
        %v307 = vld [vmem:[#allocation5 + $0xc] sm:$0xff]
        %v308 = vld [vmem:[#allocation5 + $0x14] sm:$0xf]
        %v309 = vld [vmem:[#allocation5 + $0x18] sm:$0xff]
        %v310 = vld [vmem:[#allocation5 + $0x20] sm:$0xf]
        %v311 = vld [vmem:[#allocation5 + $0x24] sm:$0xff]
        %v312 = vld [vmem:[#allocation5 + $0x2c] sm:$0xf]
        %v313 = vld [vmem:[#allocation5 + $0x30] sm:$0xff]
        %v314 = vld [vmem:[#allocation5 + $0x38] sm:$0xf]
        %v315 = vld [vmem:[#allocation5 + $0x3c] sm:$0xff]
        %v316 = vld [vmem:[#allocation5 + $0x44] sm:$0xf]
        %v317 = vld [vmem:[#allocation5 + $0x48] sm:$0xff]
        %v318 = vld [vmem:[#allocation5 + $0x50] sm:$0xf]
        %v319 = vld [vmem:[#allocation5 + $0x54] sm:$0xff]
        %v320 = vld [vmem:[#allocation5 + $0x5c] sm:$0xf]
        %v321 = vld [vmem:[#allocation5 + $0x60] sm:$0xff]
        %v322 = vld [vmem:[#allocation5 + $0x68] sm:$0xf]
        %v323 = vld [vmem:[#allocation5 + $0x6c] sm:$0xff]
        %v324 = vld [vmem:[#allocation5 + $0x74] sm:$0xf]
        %v325 = vld [vmem:[#allocation5 + $0x78] sm:$0xff]
        %v326 = vld [vmem:[#allocation5 + $0x80] sm:$0xf]
        %v327 = vld [vmem:[#allocation5 + $0x84] sm:$0xff]
        %v328 = vld [vmem:[#allocation5 + $0x8c] sm:$0xf]
        %v329 = vld [vmem:[#allocation5 + $0x90] sm:$0xff]
        %v330 = vld [vmem:[#allocation5 + $0x98] sm:$0xf]
        %v331 = vld [vmem:[#allocation5 + $0x9c] sm:$0xff]
        %v332 = vld [vmem:[#allocation5 + $0xa4] sm:$0xf]
        %v333 = vld [vmem:[#allocation5 + $0xa8] sm:$0xff]
        %v334 = vld [vmem:[#allocation5 + $0xb0] sm:$0xf]
        %v335 = vld [vmem:[#allocation5 + $0xb4] sm:$0xff]
        %v336 = vld [vmem:[#allocation5 + $0xbc] sm:$0xf]
        %v337 = vld [vmem:[%s2] sm:$0x7]
        %v339 = vlaneseq
        %v340 = vshrl.u32 %v339, 7
        %v341 = vsub.s32 0, %v340
        %v342 = vrot.slane %v337, %v341
        %v343 = vlaneseq
        %v344 = vshrl.u32 %v343, 7
        %v345 = vsub.s32 1, %v344
        %v346 = vrot.slane %v337, %v345
        %v347 = vlaneseq
        %v348 = vshrl.u32 %v347, 7
        %v349 = vsub.s32 2, %v348
        %v350 = vrot.slane %v337, %v349
        %v356 = vunpack.c.l.b16 %v303
        %v357 = vunpack.c.l.b16 %v304
        %v358 = vpack.c.b16 %v357, %v356
        %v392 = vunpack.c.l.b16 %v305
        %v393 = vunpack.c.h.b16 %v305
        %v394 = vunpack.c.l.b16 %v306
        %v395 = vunpack.c.l.b16 %v307
        %v396 = vunpack.c.h.b16 %v307
        %v397 = vunpack.c.l.b16 %v308
        %v398 = vunpack.c.l.b16 %v309
        %v399 = vunpack.c.h.b16 %v309
        %v400 = vunpack.c.l.b16 %v310
        %v401 = vunpack.c.l.b16 %v311
        %v402 = vunpack.c.h.b16 %v311
        %v403 = vunpack.c.l.b16 %v312
        %v404 = vunpack.c.l.b16 %v313
        %v405 = vunpack.c.h.b16 %v313
        %v406 = vunpack.c.l.b16 %v314
        %v407 = vunpack.c.l.b16 %v315
        %v408 = vunpack.c.h.b16 %v315
        %v409 = vunpack.c.l.b16 %v316
        %v410 = vunpack.c.l.b16 %v317
        %v411 = vunpack.c.h.b16 %v317
        %v412 = vunpack.c.l.b16 %v318
        %v413 = vunpack.c.l.b16 %v319
        %v414 = vunpack.c.h.b16 %v319
        %v415 = vunpack.c.l.b16 %v320
        %v416 = vunpack.c.l.b16 %v321
        %v417 = vunpack.c.h.b16 %v321
        %v418 = vunpack.c.l.b16 %v322
        %v419 = vunpack.c.l.b16 %v323
        %v420 = vunpack.c.h.b16 %v323
        %v421 = vunpack.c.l.b16 %v324
        %v422 = vunpack.c.l.b16 %v325
        %v423 = vunpack.c.h.b16 %v325
        %v424 = vunpack.c.l.b16 %v326
        %v425 = vunpack.c.l.b16 %v327
        %v426 = vunpack.c.h.b16 %v327
        %v427 = vunpack.c.l.b16 %v328
        %v428 = vunpack.c.l.b16 %v329
        %v429 = vunpack.c.h.b16 %v329
        %v430 = vunpack.c.l.b16 %v330
        %v431 = vunpack.c.l.b16 %v331
        %v432 = vunpack.c.h.b16 %v331
        %v433 = vunpack.c.l.b16 %v332
        %v434 = vunpack.c.l.b16 %v333
        %v435 = vunpack.c.h.b16 %v333
        %v436 = vunpack.c.l.b16 %v334
        %v437 = vunpack.c.l.b16 %v335
        %v438 = vunpack.c.h.b16 %v335
        %v439 = vunpack.c.l.b16 %v336
        %v440 = vpack.c.b16 %v395, %v392
        %v441 = vpack.c.b16 %v396, %v393
        %v442 = vpack.c.b16 %v397, %v394
        %v443 = vpack.c.b16 %v401, %v398
        %v444 = vpack.c.b16 %v402, %v399
        %v445 = vpack.c.b16 %v403, %v400
        %v446 = vpack.c.b16 %v407, %v404
        %v447 = vpack.c.b16 %v408, %v405
        %v448 = vpack.c.b16 %v409, %v406
        %v449 = vpack.c.b16 %v413, %v410
        %v450 = vpack.c.b16 %v414, %v411
        %v451 = vpack.c.b16 %v415, %v412
        %v452 = vpack.c.b16 %v419, %v416
        %v453 = vpack.c.b16 %v420, %v417
        %v454 = vpack.c.b16 %v421, %v418
        %v455 = vpack.c.b16 %v425, %v422
        %v456 = vpack.c.b16 %v426, %v423
        %v457 = vpack.c.b16 %v427, %v424
        %v458 = vpack.c.b16 %v431, %v428
        %v459 = vpack.c.b16 %v432, %v429
        %v460 = vpack.c.b16 %v433, %v430
        %v461 = vpack.c.b16 %v437, %v434
        %v462 = vpack.c.b16 %v438, %v435
        %v463 = vpack.c.b16 %v439, %v436
        %488 = vmatprep.subr.bf16.mxu0 %v462
        %489 = vmatpush1.bf16.msra.mxu0 %v461
        %490 = vmatprep.subr.bf16.mxu0 %v459
        %491 = vmatpush1.bf16.msra.mxu0 %v458
        %492 = vmatprep.subr.bf16.mxu0 %v456
        %493 = vmatpush1.bf16.msra.mxu0 %v455
        %494 = vmatprep.subr.bf16.mxu0 %v453
        %495 = vmatpush1.bf16.msra.mxu0 %v452
        %496 = vmatprep.subr.bf16.mxu0 %v450
        %497 = vmatpush1.bf16.msra.mxu0 %v449
        %498 = vmatprep.subr.bf16.mxu0 %v447
        %499 = vmatpush1.bf16.msra.mxu0 %v446
        %500 = vmatprep.subr.bf16.mxu0 %v444
        %501 = vmatpush1.bf16.msra.mxu0 %v443
        %502 = vmatprep.subr.bf16.mxu0 %v441
        %503 = vmatpush1.bf16.msra.mxu0 %v440
        %504 = vmatprep.subr.bf16.mxu0 0
        %505 = vmatpush2.bf16.msra.mxu0 0
        %506 = vmatprep.subr.bf16.mxu0 0
        %507 = vmatpush2.bf16.msra.mxu0 0
        %508 = vmatprep.subr.bf16.mxu0 0
        %509 = vmatpush2.bf16.msra.mxu0 0
        %510 = vmatprep.subr.bf16.mxu0 0
        %511 = vmatpush2.bf16.msra.mxu0 0
        %512 = vmatprep.subr.bf16.mxu0 0
        %513 = vmatpush2.bf16.msra.mxu0 0
        %514 = vmatprep.subr.bf16.mxu0 0
        %515 = vmatpush2.bf16.msra.mxu0 0
        %516 = vmatprep.subr.bf16.mxu0 0
        %517 = vmatpush2.bf16.msra.mxu0 0
        %518 = vmatprep.subr.bf16.mxu0 0
        %519 = vmatpush2.bf16.msra.mxu0 0
        %520 = vmatprep.mubr.bf16.mxu0 0
        %521 = vmatmul.mubr.bf16.gmra.mxu0 %v358
        %v522 = vpop.f32.mrf.mxu0
        %v523 = vadd.f32 %v342, %v522
        %v524 = vpop.f32.mrf.mxu0
        %v525 = vadd.f32 %v346, %v524
        %v526 = vpop.f32.mrf.mxu0
        %v527 = vadd.f32 %v342, %v526
        %v528 = vpop.f32.mrf.mxu0
        %v529 = vadd.f32 %v346, %v528
        %530 = vdwg.mxu0
        %531 = vmatprep.subr.bf16.mxu0 0
        %532 = vmatpush1.bf16.msra.mxu0 %v463
        %533 = vmatprep.subr.bf16.mxu0 0
        %534 = vmatpush1.bf16.msra.mxu0 %v460
        %535 = vmatprep.subr.bf16.mxu0 0
        %536 = vmatpush1.bf16.msra.mxu0 %v457
        %537 = vmatprep.subr.bf16.mxu0 0
        %538 = vmatpush1.bf16.msra.mxu0 %v454
        %539 = vmatprep.subr.bf16.mxu0 0
        %540 = vmatpush1.bf16.msra.mxu0 %v451
        %541 = vmatprep.subr.bf16.mxu0 0
        %542 = vmatpush1.bf16.msra.mxu0 %v448
        %543 = vmatprep.subr.bf16.mxu0 0
        %544 = vmatpush1.bf16.msra.mxu0 %v445
        %545 = vmatprep.subr.bf16.mxu0 0
        %546 = vmatpush1.bf16.msra.mxu0 %v442
        %547 = vmatprep.subr.bf16.mxu0 0
        %548 = vmatpush2.bf16.msra.mxu0 0
        %549 = vmatprep.subr.bf16.mxu0 0
        %550 = vmatpush2.bf16.msra.mxu0 0
        %551 = vmatprep.subr.bf16.mxu0 0
        %552 = vmatpush2.bf16.msra.mxu0 0
        %553 = vmatprep.subr.bf16.mxu0 0
        %554 = vmatpush2.bf16.msra.mxu0 0
        %555 = vmatprep.subr.bf16.mxu0 0
        %556 = vmatpush2.bf16.msra.mxu0 0
        %557 = vmatprep.subr.bf16.mxu0 0
        %558 = vmatpush2.bf16.msra.mxu0 0
        %559 = vmatprep.subr.bf16.mxu0 0
        %560 = vmatpush2.bf16.msra.mxu0 0
        %561 = vmatprep.subr.bf16.mxu0 0
        %562 = vmatpush2.bf16.msra.mxu0 0
        %563 = vmatprep.mubr.bf16.mxu0 0
        %564 = vmatmul.mubr.bf16.gmra.mxu0 %v358
        %v565 = vpop.f32.mrf.mxu0
        %v566 = vadd.f32 %v350, %v565
        %v567 = vpop.f32.mrf.mxu0
        %v568 = vpop.f32.mrf.mxu0
        %v569 = vadd.f32 %v350, %v568
        %v570 = vpop.f32.mrf.mxu0
        %571 = vdwg.mxu0
        %v572 = vmul.f32 %v523, 0.17677669
        %v573 = vmul.f32 %v527, 0.17677669
        %v574 = vpack.c.bf16 %v573, %v572
        %v576 = vunpack.c.l.b16 %v574
        %v577 = vunpack.c.h.b16 %v574
        %v578 = vpack.c.b16 %v576, %v576
        %v579 = vpack.c.b16 %v577, %v577
        %582 = vst [vmem:[%s283] sm:$0xf] %v578
        %583 = vst [vmem:[%s283 + $0x4] sm:$0xf] %v579
        %v584 = vpack.c.bf16 %v529, %v525
        %v586 = vunpack.c.l.b16 %v584
        %v587 = vunpack.c.h.b16 %v584
        %v588 = vpack.c.b16 %v586, %v586
        %v589 = vpack.c.b16 %v587, %v587
        %592 = vst [vmem:[%s290] sm:$0xf] %v588
        %593 = vst [vmem:[%s290 + $0x4] sm:$0xf] %v589
        %v594 = vpack.c.bf16 %v569, %v566
        %v596 = vunpack.c.l.b16 %v594
        %v597 = vunpack.c.h.b16 %v594
        %v598 = vpack.c.b16 %v596, %v596
        %v599 = vpack.c.b16 %v597, %v597
        %602 = vst [vmem:[%s297] sm:$0xf] %v598
        %603 = vst [vmem:[%s297 + $0x4] sm:$0xf] %v599
        %s604 = sand.u32 %s119, 1
        %s605 = scalar_lea.sflag [#allocation4], %s604
        %s606 = sand.u32 %s119, 1
        %s607 = smul.addr %s606, 8
        %s608 = scalar_lea.vmem [#allocation7], %s607
        %s609 = sand.u32 %s27, 1
        %s610 = scalar_lea.sflag [#allocation9], %s609
        %s611 = sand.u32 %s147, 1
        %s612 = smul.addr %s611, 8
        %s613 = scalar_lea.vmem [#allocation8], %s612
        %s614 = sand.u32 %s27, 1
        %s615 = scalar_lea.sflag [#allocation9], %s614
        %s616 = sand.u32 %s175, 1
        %s617 = smul.addr %s616, 8
        %s618 = scalar_lea.vmem [#allocation10], %s617
        // Predicated region
        $region41: #{tpu_custom_call.1} parent=31 // pred_check
          %p619 = pneg %p129
        $region42: #{tpu_custom_call.1} parent=31 // pred_check_branch
          %621 = sbr.rel (%p619) target = $region44
        $region43: #{tpu_custom_call.1} parent=31 // pred_region
          %s622 = smul.u32 2, %s32
          %s624 = ssub.s32 128, 128
          %625 = vsyncadd %s605, %s624
          %s626 = smul.addr %s31, 2
          %s627 = sadd.s32 %s622, %s626
          %s628 = smul.addr %s627, 64
          %s629 = scalar_lea.hbm %s3, %s628
          %s630 = sshll.u32 %s608, 4
          %s631 = int_to_ptr.vmem [resolvable:$true] %s630
          %636 = dma.vmem_to_hbm [thread:$0]  %s631, 128, %s629, %s605, 64, 64, 4
        $region44: #{tpu_custom_call.1} parent=31 // pred_fallthru
          _
        // Predicated region
        $region45: #{tpu_custom_call.1} parent=31 // pred_check
          %p637 = pneg %p157
        $region46: #{tpu_custom_call.1} parent=31 // pred_check_branch
          %639 = sbr.rel (%p637) target = $region48
        $region47: #{tpu_custom_call.1} parent=31 // pred_region
          %s640 = smul.u32 2, %s32
          %s642 = ssub.s32 128, 128
          %643 = vsyncadd %s610, %s642
          %s644 = smul.addr %s31, 2
          %s645 = sadd.s32 %s640, %s644
          %s646 = smul.addr %s645, 64
          %s647 = scalar_lea.hbm %s4, %s646
          %s648 = sshll.u32 %s613, 4
          %s649 = int_to_ptr.vmem [resolvable:$true] %s648
          %654 = dma.vmem_to_hbm [thread:$0]  %s649, 128, %s647, %s610, 64, 64, 4
        $region48: #{tpu_custom_call.1} parent=31 // pred_fallthru
          _
        // Predicated region
        $region49: #{tpu_custom_call.1} parent=31 // pred_check
          %p655 = pneg %p185
        $region50: #{tpu_custom_call.1} parent=31 // pred_check_branch
          %657 = sbr.rel (%p655) target = $region52
        $region51: #{tpu_custom_call.1} parent=31 // pred_region
          %s658 = smul.u32 2, %s32
          %s660 = ssub.s32 128, 128
          %661 = vsyncadd %s615, %s660
          %s662 = smul.addr %s31, 2
          %s663 = sadd.s32 %s658, %s662
          %s664 = smul.addr %s663, 64
          %s665 = scalar_lea.hbm %s5, %s664
          %s666 = sshll.u32 %s618, 4
          %s667 = int_to_ptr.vmem [resolvable:$true] %s666
          %672 = dma.vmem_to_hbm [thread:$0]  %s667, 128, %s665, %s615, 64, 64, 4
        $region52: #{tpu_custom_call.1} parent=31 // pred_fallthru
          _
      $region32: #{tpu_custom_call.1} parent=5 // pred_fallthru
        _
      %p673 = scmp.le.s32.totalorder 2, %s22
      // Predicated region
      $region53: #{tpu_custom_call.1} parent=5 // pred_check
        %p674 = pneg %p673
      $region54: #{tpu_custom_call.1} parent=5 // pred_check_branch
        %676 = sbr.rel (%p674) target = $region56
      $region55: #{tpu_custom_call.1} parent=5 // pred_region
        %s677 = ssub.s32 %s22, 2
        // Predicated region
        $region57: #{tpu_custom_call.1} parent=55 // pred_check
          %p678 = pneg %p135
        $region58: #{tpu_custom_call.1} parent=55 // pred_check_branch
          %680 = sbr.rel (%p678) target = $region60
        $region59: #{tpu_custom_call.1} parent=55 // pred_region
          %s681 = sand.u32 %s120, 1
          %s682 = scalar_lea.sflag [#allocation4], %s681
          %s683 = sand.u32 %s120, 1
          %s684 = smul.addr %s683, 8
          %s685 = scalar_lea.vmem [#allocation7], %s684
          %686 = dma.done %s682, 128
        $region60: #{tpu_custom_call.1} parent=55 // pred_fallthru
          _
        // Predicated region
        $region61: #{tpu_custom_call.1} parent=55 // pred_check
          %p687 = pneg %p163
        $region62: #{tpu_custom_call.1} parent=55 // pred_check_branch
          %689 = sbr.rel (%p687) target = $region64
        $region63: #{tpu_custom_call.1} parent=55 // pred_region
          %s690 = sand.u32 %s28, 1
          %s691 = scalar_lea.sflag [#allocation9], %s690
          %s692 = sand.u32 %s148, 1
          %s693 = smul.addr %s692, 8
          %s694 = scalar_lea.vmem [#allocation8], %s693
          %695 = dma.done %s691, 128
        $region64: #{tpu_custom_call.1} parent=55 // pred_fallthru
          _
        // Predicated region
        $region65: #{tpu_custom_call.1} parent=55 // pred_check
          %p696 = pneg %p191
        $region66: #{tpu_custom_call.1} parent=55 // pred_check_branch
          %698 = sbr.rel (%p696) target = $region68
        $region67: #{tpu_custom_call.1} parent=55 // pred_region
          %s699 = sand.u32 %s28, 1
          %s700 = scalar_lea.sflag [#allocation9], %s699
          %s701 = sand.u32 %s176, 1
          %s702 = smul.addr %s701, 8
          %s703 = scalar_lea.vmem [#allocation10], %s702
          %704 = dma.done %s700, 128
        $region68: #{tpu_custom_call.1} parent=55 // pred_fallthru
          _
      $region56: #{tpu_custom_call.1} parent=5 // pred_fallthru
        _
    $region6: #{tpu_custom_call.1} parent=1 // loop_footer
      %s26 = sadd.s32 1, %s22
    $region7: #{tpu_custom_call.1} parent=1 // loop_footer_branch
      %21 = sbr.rel target = $region3
    $region8: #{tpu_custom_call.1} parent=1 // loop_exit
      _
    %705 = vsyncpa [#allocation3], 1
    %s706 = scalar_lea.sflag [#allocation3], 1
    %707 = vsyncpa %s706, 1
    %708 = vsyncpa [#allocation6], 1
    %709 = vsyncpa [#allocation4], 1
    %s710 = scalar_lea.sflag [#allocation4], 1
    %711 = vsyncpa %s710, 1
    %712 = vsyncpa [#allocation9], 1
    %s713 = scalar_lea.sflag [#allocation9], 1
    %714 = vsyncpa %s713, 1

</llo_original>
